<compile_context>
chip_gen: v7x
topology: tpu7x:2x2x1
jax: 0.10.0
libtpu: 0.0.40
codegen_flags: <defaults>
</compile_context>

<pallas_src>
import math
from functools import partial

import jax
import jax.numpy as jnp
from jax.experimental import pallas as pl
from jax.experimental.pallas import tpu as pltpu


# ----------------------------- helpers ---------------------------------------

_GELU_C = math.sqrt(2.0 / math.pi)


def _gelu_new(x):
    # 'gelu_new' (tanh approximation) used by nanoGPT / GPT-2.  tanh routes to the EUP.
    return 0.5 * x * (1.0 + jnp.tanh(_GELU_C * (x + 0.044715 * x * x * x)))


def _round_up(x, m):
    return ((x + m - 1) // m) * m


def _gelu_bf16_default():
    # bf16 VPU/EUP paths exist on v6e/v7x; keep gelu in f32 on v5e and older chips.
    try:
        kind = jax.devices()[0].device_kind.lower()
    except Exception:
        return False
    return ("v6" in kind) or ("v7" in kind)


def _vmem_limit_bytes():
    # Cap scoped VMEM below the chip's physical capacity, leaving headroom for
    # compiler-internal scratch (important on v7x's 64 MiB/TC).
    cap = None
    try:
        cap = getattr(pltpu.get_tpu_info(), "vmem_capacity_bytes", None)
    except Exception:
        cap = None
    if not cap:
        return 64 * 1024 * 1024          # safe on every generation
    return min(int(cap * 0.85), 100 * 1024 * 1024)


# ----------------------------- Pallas kernel ----------------------------------

def mlp_kernel(x_ref, wfc_ref, bfc_ref, wproj_ref, bproj_ref, o_ref, *, gelu_bf16):
    h = pl.program_id(1)                       # reduction (hidden-slab) axis, innermost

    @pl.when(h == 0)
    def _init():
        o_ref[...] = jnp.zeros_like(o_ref)     # f32 output block doubles as accumulator

    # First matmul slab: (TM, D)bf16 @ (D, TH)bf16 -> f32 (TM, TH).
    x_bf = x_ref[...].astype(jnp.bfloat16)     # in-kernel cast (no wrapper pass over x)
    a = jnp.dot(x_bf, wfc_ref[...], preferred_element_type=jnp.float32)

    if gelu_bf16:
        # bf16 VPU/EUP path (v6e/v7x): halves elementwise work and the temp footprint.
        a = _gelu_new((a + bfc_ref[...]).astype(jnp.bfloat16))
    else:
        # f32 path (v5e and older have no bf16 VPU/EUP).
        a = _gelu_new(a + bfc_ref[...]).astype(jnp.bfloat16)

    # Second matmul slab, accumulated over hidden slabs: (TM, TH) @ (TH, D) -> (TM, D).
    o_ref[...] += jnp.dot(a, wproj_ref[...], preferred_element_type=jnp.float32)

    @pl.when(h == pl.num_programs(1) - 1)
    def _finalize():
        o_ref[...] += bproj_ref[...]


# ----------------------------- wrapper -----------------------------------------

def mlp_forward(x, wfc, bfc, wproj, bproj, *,
                tm_target=512, th_target=512, gelu_bf16=None):
    """y = gelu_new(x @ Wfc + bfc) @ Wproj + bproj   (dropout = identity, eval mode).

    x:      (..., D) float32
    wfc:    (D, 4D)  bfloat16 (pre-transposed Linear weight)
    bfc:    (1, 4D)  float32
    wproj:  (4D, D)  bfloat16
    bproj:  (1, D)   float32
    """
    if gelu_bf16 is None:
        gelu_bf16 = _gelu_bf16_default()

    orig_shape = x.shape
    D = orig_shape[-1]
    H = wfc.shape[1]

    x2 = x.reshape(-1, D)                      # keep f32; cast to bf16 inside the kernel
    M = x2.shape[0]

    # --- tile selection + padding (never shrink tiles for awkward M/H) ---
    TM = min(tm_target, _round_up(M, 8))
    M_pad = _round_up(M, TM)
    if M_pad != M:
        x2 = jnp.pad(x2, ((0, M_pad - M), (0, 0)))

    TH = min(th_target, _round_up(H, 128))
    H_pad = _round_up(H, TH)
    if H_pad != H:
        # zero-padded hidden columns contribute gelu(0 + 0) = 0 to the output
        wfc = jnp.pad(wfc, ((0, 0), (0, H_pad - H)))
        bfc = jnp.pad(bfc, ((0, 0), (0, H_pad - H)))
        wproj = jnp.pad(wproj, ((0, H_pad - H), (0, 0)))

    grid = (M_pad // TM, H_pad // TH)

    out = pl.pallas_call(
        partial(mlp_kernel, gelu_bf16=gelu_bf16),
        out_shape=jax.ShapeDtypeStruct((M_pad, D), jnp.float32),
        grid_spec=pltpu.PrefetchScalarGridSpec(
            num_scalar_prefetch=0,
            grid=grid,
            in_specs=[
                pl.BlockSpec((TM, D), lambda m, h: (m, 0)),   # x rows (f32)
                pl.BlockSpec((D, TH), lambda m, h: (0, h)),   # Wfc slab (bf16)
                pl.BlockSpec((1, TH), lambda m, h: (0, h)),   # bfc slab
                pl.BlockSpec((TH, D), lambda m, h: (h, 0)),   # Wproj slab (bf16)
                pl.BlockSpec((1, D), lambda m, h: (0, 0)),    # bproj (grid-invariant)
            ],
            out_specs=pl.BlockSpec((TM, D), lambda m, h: (m, 0)),
        ),
        compiler_params=pltpu.CompilerParams(
            dimension_semantics=("parallel", "arbitrary"),
            vmem_limit_bytes=_vmem_limit_bytes(),
        ),
    )(x2, wfc, bfc, wproj, bproj)

    if M_pad != M:
        out = out[:M]
    return out.reshape(orig_shape)


# ----------------------------- plain-JAX reference ------------------------------

def mlp_reference(x, wfc, bfc, wproj, bproj, *, gelu_bf16):
    # Mirrors the kernel's precision choices so the comparison is apples-to-apples.
    xb = x.astype(jnp.bfloat16)
    a = jnp.dot(xb, wfc, preferred_element_type=jnp.float32)
    if gelu_bf16:
        a = _gelu_new((a + bfc).astype(jnp.bfloat16))
    else:
        a = _gelu_new(a + bfc).astype(jnp.bfloat16)
    y = jnp.dot(a, wproj, preferred_element_type=jnp.float32) + bproj
    return y


# ----------------------------- parameter init ----------------------------------

def init_mlp_params(key, D):
    k0, k1, k2, k3 = jax.random.split(key, 4)
    H = 4 * D
    wfc = (jax.random.normal(k0, (D, H), jnp.float32) / math.sqrt(D)).astype(jnp.bfloat16)
    bfc = 0.02 * jax.random.normal(k1, (1, H), jnp.float32)
    wproj = (jax.random.normal(k2, (H, D), jnp.float32) / math.sqrt(H)).astype(jnp.bfloat16)
    bproj = 0.02 * jax.random.normal(k3, (1, D), jnp.float32)
    return wfc, bfc, wproj, bproj


# ----------------------------- main ---------------------------------------------

if __name__ == "__main__":
    key = jax.random.PRNGKey(0)
    kx1, kp1, kx2, kp2 = jax.random.split(key, 4)

    gelu_bf16 = _gelu_bf16_default()

    # --- small smoke test (shapes implied by the module spec) ---
    B, T, D = 2, 8, 32
    x_small = jax.random.normal(kx1, (B, T, D), jnp.float32)
    p_small = init_mlp_params(kp1, D)

    y_small = jax.block_until_ready(mlp_forward(x_small, *p_small, gelu_bf16=gelu_bf16))
    assert y_small.shape == (B, T, D) and y_small.dtype == jnp.float32
    ref_small = mlp_reference(x_small, *p_small, gelu_bf16=gelu_bf16)
    assert jnp.allclose(y_small, ref_small, rtol=2e-3, atol=2e-3), "small-shape mismatch"

    # --- tiled test: exercises M padding, multiple M tiles and the hidden-slab
    #     accumulator (M = 200 pads to 256, grid = (2, 2)) ---
    B2, T2, D2 = 2, 100, 256                      # M = 200 rows, H = 1024
    x_med = jax.random.normal(kx2, (B2, T2, D2), jnp.float32)
    p_med = init_mlp_params(kp2, D2)

    y_med = jax.block_until_ready(
        mlp_forward(x_med, *p_med, tm_target=128, th_target=512, gelu_bf16=gelu_bf16))
    assert y_med.shape == (B2, T2, D2) and y_med.dtype == jnp.float32
    ref_med = mlp_reference(x_med, *p_med, gelu_bf16=gelu_bf16)
    assert jnp.allclose(y_med, ref_med, rtol=2e-3, atol=2e-3), "tiled-shape mismatch"

    print("KERNEL_OK")
</pallas_src>

<mosaic_0001>
module attributes {stable_mosaic.version = 11 : i64} {
  func.func @mlp_kernel(%arg0: i32, %arg1: i32, %arg2: memref<16x32xf32, #tpu.memory_space<vmem>>, %arg3: memref<32x128xbf16, #tpu.memory_space<vmem>>, %arg4: memref<1x128xf32, #tpu.memory_space<vmem>>, %arg5: memref<128x32xbf16, #tpu.memory_space<vmem>>, %arg6: memref<1x32xf32, #tpu.memory_space<vmem>>, %arg7: memref<16x32xf32, #tpu.memory_space<vmem>>) attributes {dimension_semantics = [#tpu.dimension_semantics<parallel>, #tpu.dimension_semantics<arbitrary>], iteration_bounds = array<i64: 1, 1>, scalar_prefetch = 0 : i64, scratch_operands = 0 : i64, tpu.core_type = #tpu.core_type<tc>, window_params = [{transform_indices = @transform_0, window_bounds = array<i64: 16, 32>}, {transform_indices = @transform_1, window_bounds = array<i64: 32, 128>}, {transform_indices = @transform_2, window_bounds = array<i64: 1, 128>}, {transform_indices = @transform_3, window_bounds = array<i64: 128, 32>}, {pipeline_mode = #tpu.pipeline_mode<synchronous>, transform_indices = @transform_4, window_bounds = array<i64: 1, 32>}, {transform_indices = @transform_5, window_bounds = array<i64: 16, 32>}]} {
    %c0_i32 = arith.constant 0 : i32
    %0 = arith.cmpi eq, %arg1, %c0_i32 : i32
    %1 = arith.extui %0 : i1 to i32
    %c0_i32_0 = arith.constant 0 : i32
    %2 = arith.cmpi ne, %1, %c0_i32_0 : i32
    scf.if %2 {
      %cst_19 = arith.constant 0.000000e+00 : f32
      %32 = vector.broadcast %cst_19 : f32 to vector<16x32xf32>
      %c0_20 = arith.constant 0 : index
      %c0_21 = arith.constant 0 : index
      %33 = vector.load %arg7[%c0_20, %c0_21] : memref<16x32xf32, #tpu.memory_space<vmem>>, vector<16x32xf32>
      tpu.vector_store %arg7[%c0_20, %c0_21], %32 {strides = array<i32>} : memref<16x32xf32, #tpu.memory_space<vmem>>, vector<16x32xf32>,
    } else {
    }
    %c0 = arith.constant 0 : index
    %c0_1 = arith.constant 0 : index
    %3 = vector.load %arg2[%c0, %c0_1] : memref<16x32xf32, #tpu.memory_space<vmem>>, vector<16x32xf32>
    %4 = arith.truncf %3 : vector<16x32xf32> to vector<16x32xbf16>
    %c0_2 = arith.constant 0 : index
    %c0_3 = arith.constant 0 : index
    %5 = vector.load %arg3[%c0_2, %c0_3] : memref<32x128xbf16, #tpu.memory_space<vmem>>, vector<32x128xbf16>
    %cst = arith.constant dense<0.000000e+00> : vector<16x128xf32>
    %6 = tpu.matmul %4, %5, %cst {dimension_numbers = #tpu.dot_dimension_numbers<[1], [0], [0], [1], [0, 0, 1, 1], [], []>} : vector<16x32xbf16>, vector<32x128xbf16>, vector<16x128xf32> -> vector<16x128xf32>
    %c0_4 = arith.constant 0 : index
    %c0_5 = arith.constant 0 : index
    %7 = vector.load %arg4[%c0_4, %c0_5] : memref<1x128xf32, #tpu.memory_space<vmem>>, vector<1x128xf32>
    %8 = vector.broadcast %7 : vector<1x128xf32> to vector<16x128xf32>
    %9 = arith.addf %6, %8 : vector<16x128xf32>
    %cst_6 = arith.constant 5.000000e-01 : f32
    %10 = vector.broadcast %cst_6 : f32 to vector<16x128xf32>
    %11 = arith.mulf %10, %9 : vector<16x128xf32>
    %cst_7 = arith.constant 4.471500e-02 : f32
    %12 = vector.broadcast %cst_7 : f32 to vector<16x128xf32>
    %13 = arith.mulf %12, %9 : vector<16x128xf32>
    %14 = arith.mulf %13, %9 : vector<16x128xf32>
    %15 = arith.mulf %14, %9 : vector<16x128xf32>
    %16 = arith.addf %9, %15 : vector<16x128xf32>
    %cst_8 = arith.constant 0.797884583 : f32
    %17 = vector.broadcast %cst_8 : f32 to vector<16x128xf32>
    %18 = arith.mulf %17, %16 : vector<16x128xf32>
    %19 = math.tanh %18 : vector<16x128xf32>
    %cst_9 = arith.constant 1.000000e+00 : f32
    %20 = vector.broadcast %cst_9 : f32 to vector<16x128xf32>
    %21 = arith.addf %20, %19 : vector<16x128xf32>
    %22 = arith.mulf %11, %21 : vector<16x128xf32>
    %23 = arith.truncf %22 : vector<16x128xf32> to vector<16x128xbf16>
    %c0_10 = arith.constant 0 : index
    %c0_11 = arith.constant 0 : index
    %24 = vector.load %arg7[%c0_10, %c0_11] : memref<16x32xf32, #tpu.memory_space<vmem>>, vector<16x32xf32>
    %c0_12 = arith.constant 0 : index
    %c0_13 = arith.constant 0 : index
    %25 = vector.load %arg5[%c0_12, %c0_13] : memref<128x32xbf16, #tpu.memory_space<vmem>>, vector<128x32xbf16>
    %cst_14 = arith.constant dense<0.000000e+00> : vector<16x32xf32>
    %26 = tpu.matmul %23, %25, %cst_14 {dimension_numbers = #tpu.dot_dimension_numbers<[1], [0], [0], [1], [0, 0, 1, 1], [], []>} : vector<16x128xbf16>, vector<128x32xbf16>, vector<16x32xf32> -> vector<16x32xf32>
    %27 = arith.addf %24, %26 : vector<16x32xf32>
    %c0_15 = arith.constant 0 : index
    %c0_16 = arith.constant 0 : index
    %28 = vector.load %arg7[%c0_15, %c0_16] : memref<16x32xf32, #tpu.memory_space<vmem>>, vector<16x32xf32>
    tpu.vector_store %arg7[%c0_15, %c0_16], %27 {strides = array<i32>} : memref<16x32xf32, #tpu.memory_space<vmem>>, vector<16x32xf32>,
    %c0_i32_17 = arith.constant 0 : i32
    %29 = arith.cmpi eq, %arg1, %c0_i32_17 : i32
    %30 = arith.extui %29 : i1 to i32
    %c0_i32_18 = arith.constant 0 : i32
    %31 = arith.cmpi ne, %30, %c0_i32_18 : i32
    scf.if %31 {
      %c0_19 = arith.constant 0 : index
      %c0_20 = arith.constant 0 : index
      %32 = vector.load %arg7[%c0_19, %c0_20] : memref<16x32xf32, #tpu.memory_space<vmem>>, vector<16x32xf32>
      %c0_21 = arith.constant 0 : index
      %c0_22 = arith.constant 0 : index
      %33 = vector.load %arg6[%c0_21, %c0_22] : memref<1x32xf32, #tpu.memory_space<vmem>>, vector<1x32xf32>
      %34 = vector.broadcast %33 : vector<1x32xf32> to vector<16x32xf32>
      %35 = arith.addf %32, %34 : vector<16x32xf32>
      %c0_23 = arith.constant 0 : index
      %c0_24 = arith.constant 0 : index
      %36 = vector.load %arg7[%c0_23, %c0_24] : memref<16x32xf32, #tpu.memory_space<vmem>>, vector<16x32xf32>
      tpu.vector_store %arg7[%c0_23, %c0_24], %35 {strides = array<i32>} : memref<16x32xf32, #tpu.memory_space<vmem>>, vector<16x32xf32>,
    } else {
    }
    return
  }
  func.func @transform_0(%arg0: i32, %arg1: i32) -> (i32, i32) {
    %c0_i32 = arith.constant 0 : i32
    %c0_i32_0 = arith.constant 0 : i32
    return %arg0, %c0_i32 : i32, i32
  }
  func.func @transform_1(%arg0: i32, %arg1: i32) -> (i32, i32) {
    %c0_i32 = arith.constant 0 : i32
    %c0_i32_0 = arith.constant 0 : i32
    return %c0_i32, %arg1 : i32, i32
  }
  func.func @transform_2(%arg0: i32, %arg1: i32) -> (i32, i32) {
    %c0_i32 = arith.constant 0 : i32
    %c0_i32_0 = arith.constant 0 : i32
    return %c0_i32, %arg1 : i32, i32
  }
  func.func @transform_3(%arg0: i32, %arg1: i32) -> (i32, i32) {
    %c0_i32 = arith.constant 0 : i32
    %c0_i32_0 = arith.constant 0 : i32
    return %arg1, %c0_i32 : i32, i32
  }
  func.func @transform_4(%arg0: i32, %arg1: i32) -> (i32, i32) {
    %c0_i32 = arith.constant 0 : i32
    %c0_i32_0 = arith.constant 0 : i32
    %c0_i32_1 = arith.constant 0 : i32
    return %c0_i32, %c0_i32_0 : i32, i32
  }
  func.func @transform_5(%arg0: i32, %arg1: i32) -> (i32, i32) {
    %c0_i32 = arith.constant 0 : i32
    %c0_i32_0 = arith.constant 0 : i32
    return %arg0, %c0_i32 : i32, i32
  }
}

</mosaic_0001>

<llo_original>
// kernel: tpu_custom_call.1
$region0: #{tpu_custom_call.1}
  #allocation0 [shape = 'u32[]', space=smem, size = 0x4, offset = 0x4, fixed_abs, tag = 'smem constant byte address 0x4 - core index']
  #allocation1 [shape = 'u32[144,128]{1,0:T(1,128)}', space=vmem, size = 0x12000, scoped, tag = 'internal scratch']
  %s0 = inlined_call_operand.hbm [shape: f32[16,32], index: 0, kind: input, shape index: {}]
  %s1 = inlined_call_operand.hbm [shape: bf16[32,128], index: 1, kind: input, shape index: {}]
  %s2 = inlined_call_operand.hbm [shape: f32[1,128], index: 2, kind: input, shape index: {}]
  %s3 = inlined_call_operand.hbm [shape: bf16[128,32], index: 3, kind: input, shape index: {}]
  %s4 = inlined_call_operand.hbm [shape: f32[1,32], index: 4, kind: input, shape index: {}]
  %s5 = inlined_call_operand.hbm [shape: f32[16,32], index: 5, kind: output, shape index: {}]
  %s6 = sld [smem:[#allocation0]]
  $region58: #{tpu_custom_call.1} parent=0
    _
  %s8 = ssub.s32 1, %s6
  %s9 = scalar_select 0, %s8, %s6
  $region1: #{tpu_custom_call.1} parent=0
    #allocation2 [shape = 'u8[8192]{0}', space=vmem, size = 0x2000, scoped, tag = 'input window, operand 0, single buffered']
    #allocation3 [shape = 's32[1]{0}', space=sflag, size = 0x4, scoped, tag = 'scoped memory for tpu_custom_call.1']
    #allocation4 [shape = 's32[1]{0}', space=sflag, size = 0x4, scoped, tag = 'scoped memory for tpu_custom_call.1']
    #allocation5 [shape = 'u8[8192]{0}', space=vmem, size = 0x2000, scoped, tag = 'input window, operand 1, single buffered']
    #allocation6 [shape = 's32[1]{0}', space=sflag, size = 0x4, scoped, tag = 'scoped memory for tpu_custom_call.1']
    #allocation7 [shape = 'u8[512]{0}', space=vmem, size = 0x400, scoped, tag = 'input window, operand 2, single buffered']
    #allocation8 [shape = 'u8[32768]{0}', space=vmem, size = 0x8000, scoped, tag = 'input window, operand 3, single buffered']
    #allocation9 [shape = 's32[1]{0}', space=sflag, size = 0x4, scoped, tag = 'scoped memory for tpu_custom_call.1']
    #allocation10 [shape = 'u8[512]{0}', space=vmem, size = 0x400, scoped, tag = 'input window, operand 4, single buffered']
    #allocation11 [shape = 'u8[8192]{0}', space=vmem, size = 0x2000, scoped, tag = 'output window, operand 0, single buffered']
    %10 = vsyncpa [#allocation3], 0
    %11 = vsyncpa [#allocation6], 0
    %12 = vsyncpa [#allocation9], 0
    %13 = vsyncpa [#allocation4], 0
    // Predicated region
    $region2: #{tpu_custom_call.1} parent=1 // pred_check
      _
    $region3: #{tpu_custom_call.1} parent=1 // pred_check_branch
      %15 = sbr.rel (0) target = $region5
    $region4: #{tpu_custom_call.1} parent=1 // pred_region
      %s17 = ssub.s32 256, 256
      %18 = vsyncadd [#allocation3], %s17
      %s19 = sshll.u32 [#allocation2], 4
      %s20 = int_to_ptr.vmem [resolvable:$true] %s19
      %25 = dma.hbm_to_vmem [thread:$0]  %s0, 256, %s20, [#allocation3], 128, 128, 8
    $region5: #{tpu_custom_call.1} parent=1 // pred_fallthru
      _
    // Predicated region
    $region6: #{tpu_custom_call.1} parent=1 // pred_check
      _
    $region7: #{tpu_custom_call.1} parent=1 // pred_check_branch
      %27 = sbr.rel (0) target = $region9
    $region8: #{tpu_custom_call.1} parent=1 // pred_region
      %s29 = ssub.s32 256, 256
      %30 = vsyncadd [#allocation6], %s29
      %s31 = sshll.u32 [#allocation5], 4
      %s32 = int_to_ptr.vmem [resolvable:$true] %s31
      %37 = dma.hbm_to_vmem [thread:$0]  %s1, 256, %s32, [#allocation6], 64, 64, 4
    $region9: #{tpu_custom_call.1} parent=1 // pred_fallthru
      _
    // Predicated region
    $region10: #{tpu_custom_call.1} parent=1 // pred_check
      _
    $region11: #{tpu_custom_call.1} parent=1 // pred_check_branch
      %39 = sbr.rel (0) target = $region13
    $region12: #{tpu_custom_call.1} parent=1 // pred_region
      %s41 = ssub.s32 16, 16
      %42 = vsyncadd [#allocation6], %s41
      %s44 = sshll.u32 [#allocation7], 4
      %s45 = int_to_ptr.vmem [resolvable:$true] %s44
      %47 = dma.hbm_to_vmem [thread:$0]  %s2, 16, %s45, [#allocation6]
    $region13: #{tpu_custom_call.1} parent=1 // pred_fallthru
      _
    // Predicated region
    $region14: #{tpu_custom_call.1} parent=1 // pred_check
      _
    $region15: #{tpu_custom_call.1} parent=1 // pred_check_branch
      %49 = sbr.rel (0) target = $region17
    $region16: #{tpu_custom_call.1} parent=1 // pred_region
      %s51 = ssub.s32 1024, 1024
      %52 = vsyncadd [#allocation9], %s51
      %s53 = sshll.u32 [#allocation8], 4
      %s54 = int_to_ptr.vmem [resolvable:$true] %s53
      %59 = dma.hbm_to_vmem [thread:$0]  %s3, 1024, %s54, [#allocation9], 64, 64, 4
    $region17: #{tpu_custom_call.1} parent=1 // pred_fallthru
      _
    // Predicated region
    $region18: #{tpu_custom_call.1} parent=1 // pred_check
      _
    $region19: #{tpu_custom_call.1} parent=1 // pred_check_branch
      %61 = sbr.rel (0) target = $region21
    $region20: #{tpu_custom_call.1} parent=1 // pred_region
      %s63 = ssub.s32 16, 16
      %64 = vsyncadd [#allocation9], %s63
      %s66 = sshll.u32 [#allocation10], 4
      %s67 = int_to_ptr.vmem [resolvable:$true] %s66
      %69 = dma.hbm_to_vmem [thread:$0]  %s4, 16, %s67, [#allocation9]
    $region21: #{tpu_custom_call.1} parent=1 // pred_fallthru
      _
    // Predicated region
    $region22: #{tpu_custom_call.1} parent=1 // pred_check
      _
    $region23: #{tpu_custom_call.1} parent=1 // pred_check_branch
      %71 = sbr.rel (0) target = $region25
    $region24: #{tpu_custom_call.1} parent=1 // pred_region
      %72 = dma.done [#allocation3], 256
    $region25: #{tpu_custom_call.1} parent=1 // pred_fallthru
      _
    // Predicated region
    $region26: #{tpu_custom_call.1} parent=1 // pred_check
      _
    $region27: #{tpu_custom_call.1} parent=1 // pred_check_branch
      %74 = sbr.rel (0) target = $region29
    $region28: #{tpu_custom_call.1} parent=1 // pred_region
      %75 = dma.done [#allocation6], 256
    $region29: #{tpu_custom_call.1} parent=1 // pred_fallthru
      _
    // Predicated region
    $region30: #{tpu_custom_call.1} parent=1 // pred_check
      _
    $region31: #{tpu_custom_call.1} parent=1 // pred_check_branch
      %77 = sbr.rel (0) target = $region33
    $region32: #{tpu_custom_call.1} parent=1 // pred_region
      %78 = dma.done [#allocation6], 16
    $region33: #{tpu_custom_call.1} parent=1 // pred_fallthru
      _
    // Predicated region
    $region34: #{tpu_custom_call.1} parent=1 // pred_check
      _
    $region35: #{tpu_custom_call.1} parent=1 // pred_check_branch
      %80 = sbr.rel (0) target = $region37
    $region36: #{tpu_custom_call.1} parent=1 // pred_region
      %81 = dma.done [#allocation9], 1024
    $region37: #{tpu_custom_call.1} parent=1 // pred_fallthru
      _
    // Predicated region
    $region38: #{tpu_custom_call.1} parent=1 // pred_check
      _
    $region39: #{tpu_custom_call.1} parent=1 // pred_check_branch
      %83 = sbr.rel (0) target = $region41
    $region40: #{tpu_custom_call.1} parent=1 // pred_region
      %84 = dma.done [#allocation9], 16
    $region41: #{tpu_custom_call.1} parent=1 // pred_fallthru
      _
    %p86 = scmp.eq.s32.totalorder 0, 0
    // Predicated region
    $region42: #{tpu_custom_call.1} parent=1 // pred_check
      %p87 = pneg %p86
    $region43: #{tpu_custom_call.1} parent=1 // pred_check_branch
      %89 = sbr.rel (%p87) target = $region45
    $region44: #{tpu_custom_call.1} parent=1 // pred_region
      %vm90 = vcmask 261120
      %91 = vst.msk [vmem:[#allocation11] sm:$0xff] %vm90, 0.0
      %92 = vst.msk [vmem:[#allocation11 + $0x8] sm:$0xff] %vm90, 0.0
    $region45: #{tpu_custom_call.1} parent=1 // pred_fallthru
      _
    %v93 = vld [vmem:[#allocation2] sm:$0xff]
    %v94 = vld [vmem:[#allocation2 + $0x8] sm:$0xff]
    %v95 = vpack.c.bf16 %v94, %v93
    %v96 = vld [vmem:[#allocation5] sm:$0xf]
    %v97 = vld [vmem:[#allocation5 + $0x4] sm:$0xf]
    %v98 = vld [vmem:[#allocation5 + $0x8] sm:$0xf]
    %v99 = vld [vmem:[#allocation5 + $0xc] sm:$0xf]
    %v100 = vld [vmem:[#allocation7] sm:$0x1]
    %v102 = vlaneseq
    %v103 = vshrl.u32 %v102, 7
    %v104 = vsub.s32 0, %v103
    %v105 = vrot.slane %v100, %v104
    %v111 = vunpack.c.l.b16 %v96
    %v112 = vunpack.c.l.b16 %v97
    %v113 = vunpack.c.l.b16 %v98
    %v114 = vunpack.c.l.b16 %v99
    %v115 = vpack.c.b16 %v112, %v111
    %v116 = vpack.c.b16 %v114, %v113
    %vm119 = vcmask 261120
    %v121 = vsel %vm119, %v95, 0
    %123 = vmatprep.subr.bf16.mxu0 0
    %124 = vmatpush1.bf16.msra.mxu0 %v115
    %125 = vmatprep.subr.bf16.mxu0 0
    %126 = vmatpush1.bf16.msra.mxu0 %v116
    %127 = vmatprep.subr.bf16.mxu0 0
    %128 = vmatpush1.bf16.msra.mxu0 0
    %129 = vmatprep.subr.bf16.mxu0 0
    %130 = vmatpush1.bf16.msra.mxu0 0
    %131 = vmatprep.subr.bf16.mxu0 0
    %132 = vmatpush1.bf16.msra.mxu0 0
    %133 = vmatprep.subr.bf16.mxu0 0
    %134 = vmatpush1.bf16.msra.mxu0 0
    %135 = vmatprep.subr.bf16.mxu0 0
    %136 = vmatpush1.bf16.msra.mxu0 0
    %137 = vmatprep.subr.bf16.mxu0 0
    %138 = vmatpush1.bf16.msra.mxu0 0
    %139 = vmatprep.subr.bf16.mxu0 0
    %140 = vmatpush1.bf16.msra.mxu0 0
    %141 = vmatprep.subr.bf16.mxu0 0
    %142 = vmatpush1.bf16.msra.mxu0 0
    %143 = vmatprep.subr.bf16.mxu0 0
    %144 = vmatpush1.bf16.msra.mxu0 0
    %145 = vmatprep.subr.bf16.mxu0 0
    %146 = vmatpush1.bf16.msra.mxu0 0
    %147 = vmatprep.subr.bf16.mxu0 0
    %148 = vmatpush1.bf16.msra.mxu0 0
    %149 = vmatprep.subr.bf16.mxu0 0
    %150 = vmatpush1.bf16.msra.mxu0 0
    %151 = vmatprep.subr.bf16.mxu0 0
    %152 = vmatpush1.bf16.msra.mxu0 0
    %153 = vmatprep.subr.bf16.mxu0 0
    %154 = vmatpush1.bf16.msra.mxu0 0
    %155 = vmatprep.mubr.bf16.mxu0 0
    %156 = vmatmul.mubr.bf16.gmra.mrb[0].mxu0 %v121
    %v157 = vpop.f32.mrb[0].mxu0
    %v158 = vadd.f32 %v105, %v157
    %v159 = vpop.f32.mrb[0].mxu0
    %v160 = vpop.f32.mrb[0].mxu0
    %v161 = vadd.f32 %v105, %v160
    %v162 = vpop.f32.mrb[0].mxu0
    %163 = vdwg.mxu0
    %v164 = vmul.f32 %v158, 0.5
    %v165 = vmul.f32 %v161, 0.5
    %v166 = vmul.f32 %v158, 0.044715
    %v167 = vmul.f32 %v161, 0.044715
    %v168 = vmul.f32 %v166, %v158
    %v169 = vmul.f32 %v167, %v161
    %v170 = vmul.f32 %v168, %v158
    %v171 = vmul.f32 %v169, %v161
    %v172 = vadd.f32 %v158, %v170
    %v173 = vadd.f32 %v161, %v171
    %v174 = vmul.f32 %v172, 0.7978846
    %v175 = vmul.f32 %v173, 0.7978846
    %v176 = vtanh.pop %v174
    %v177 = vtanh.pop %v175
    %v178 = vadd.f32 %v176, 1.0
    %v179 = vadd.f32 %v177, 1.0
    %v180 = vmul.f32 %v164, %v178
    %v181 = vmul.f32 %v165, %v179
    %v182 = vpack.c.bf16 %v181, %v180
    %v183 = vld [vmem:[#allocation11] sm:$0xff]
    %v184 = vld [vmem:[#allocation11 + $0x8] sm:$0xff]
    %v185 = vld [vmem:[#allocation8] sm:$0xf]
    %v186 = vld [vmem:[#allocation8 + $0x4] sm:$0xf]
    %v187 = vld [vmem:[#allocation8 + $0x8] sm:$0xf]
    %v188 = vld [vmem:[#allocation8 + $0xc] sm:$0xf]
    %v189 = vld [vmem:[#allocation8 + $0x10] sm:$0xf]
    %v190 = vld [vmem:[#allocation8 + $0x14] sm:$0xf]
    %v191 = vld [vmem:[#allocation8 + $0x18] sm:$0xf]
    %v192 = vld [vmem:[#allocation8 + $0x1c] sm:$0xf]
    %v193 = vld [vmem:[#allocation8 + $0x20] sm:$0xf]
    %v194 = vld [vmem:[#allocation8 + $0x24] sm:$0xf]
    %v195 = vld [vmem:[#allocation8 + $0x28] sm:$0xf]
    %v196 = vld [vmem:[#allocation8 + $0x2c] sm:$0xf]
    %v197 = vld [vmem:[#allocation8 + $0x30] sm:$0xf]
    %v198 = vld [vmem:[#allocation8 + $0x34] sm:$0xf]
    %v199 = vld [vmem:[#allocation8 + $0x38] sm:$0xf]
    %v200 = vld [vmem:[#allocation8 + $0x3c] sm:$0xf]
    %v217 = vunpack.c.l.b16 %v185
    %v218 = vunpack.c.l.b16 %v186
    %v219 = vunpack.c.l.b16 %v187
    %v220 = vunpack.c.l.b16 %v188
    %v221 = vunpack.c.l.b16 %v189
    %v222 = vunpack.c.l.b16 %v190
    %v223 = vunpack.c.l.b16 %v191
    %v224 = vunpack.c.l.b16 %v192
    %v225 = vunpack.c.l.b16 %v193
    %v226 = vunpack.c.l.b16 %v194
    %v227 = vunpack.c.l.b16 %v195
    %v228 = vunpack.c.l.b16 %v196
    %v229 = vunpack.c.l.b16 %v197
    %v230 = vunpack.c.l.b16 %v198
    %v231 = vunpack.c.l.b16 %v199
    %v232 = vunpack.c.l.b16 %v200
    %v233 = vpack.c.b16 %v218, %v217
    %v234 = vpack.c.b16 %v220, %v219
    %v235 = vpack.c.b16 %v222, %v221
    %v236 = vpack.c.b16 %v224, %v223
    %v237 = vpack.c.b16 %v226, %v225
    %v238 = vpack.c.b16 %v228, %v227
    %v239 = vpack.c.b16 %v230, %v229
    %v240 = vpack.c.b16 %v232, %v231
    %249 = vmatprep.subr.bf16.mxu0 0
    %250 = vmatpush1.bf16.msra.mxu0 %v233
    %251 = vmatprep.subr.bf16.mxu0 0
    %252 = vmatpush1.bf16.msra.mxu0 %v234
    %253 = vmatprep.subr.bf16.mxu0 0
    %254 = vmatpush1.bf16.msra.mxu0 %v235
    %255 = vmatprep.subr.bf16.mxu0 0
    %256 = vmatpush1.bf16.msra.mxu0 %v236
    %257 = vmatprep.subr.bf16.mxu0 0
    %258 = vmatpush1.bf16.msra.mxu0 %v237
    %259 = vmatprep.subr.bf16.mxu0 0
    %260 = vmatpush1.bf16.msra.mxu0 %v238
    %261 = vmatprep.subr.bf16.mxu0 0
    %262 = vmatpush1.bf16.msra.mxu0 %v239
    %263 = vmatprep.subr.bf16.mxu0 0
    %264 = vmatpush1.bf16.msra.mxu0 %v240
    %265 = vmatprep.subr.bf16.mxu0 0
    %266 = vmatpush1.bf16.msra.mxu0 0
    %267 = vmatprep.subr.bf16.mxu0 0
    %268 = vmatpush1.bf16.msra.mxu0 0
    %269 = vmatprep.subr.bf16.mxu0 0
    %270 = vmatpush1.bf16.msra.mxu0 0
    %271 = vmatprep.subr.bf16.mxu0 0
    %272 = vmatpush1.bf16.msra.mxu0 0
    %273 = vmatprep.subr.bf16.mxu0 0
    %274 = vmatpush1.bf16.msra.mxu0 0
    %275 = vmatprep.subr.bf16.mxu0 0
    %276 = vmatpush1.bf16.msra.mxu0 0
    %277 = vmatprep.subr.bf16.mxu0 0
    %278 = vmatpush1.bf16.msra.mxu0 0
    %279 = vmatprep.subr.bf16.mxu0 0
    %280 = vmatpush1.bf16.msra.mxu0 0
    %281 = vmatprep.mubr.bf16.mxu0 0
    %282 = vmatmul.mubr.bf16.gmra.mrb[0].mxu0 %v182
    %v283 = vpop.f32.mrb[0].mxu0
    %v284 = vadd.f32 0.0, %v283
    %v285 = vpop.f32.mrb[0].mxu0
    %v286 = vpop.f32.mrb[0].mxu0
    %v287 = vadd.f32 0.0, %v286
    %v288 = vpop.f32.mrb[0].mxu0
    %289 = vdwg.mxu0
    %v290 = vadd.f32 %v183, %v284
    %v291 = vadd.f32 %v184, %v287
    %292 = vst.msk [vmem:[#allocation11] sm:$0xff] %vm119, %v290
    %293 = vst.msk [vmem:[#allocation11 + $0x8] sm:$0xff] %vm119, %v291
    // Predicated region
    $region46: #{tpu_custom_call.1} parent=1 // pred_check
      %p294 = pneg %p86
    $region47: #{tpu_custom_call.1} parent=1 // pred_check_branch
      %296 = sbr.rel (%p294) target = $region49
    $region48: #{tpu_custom_call.1} parent=1 // pred_region
      %v297 = vld [vmem:[#allocation11] sm:$0xff]
      %v298 = vld [vmem:[#allocation11 + $0x8] sm:$0xff]
      %v299 = vld [vmem:[#allocation10] sm:$0x1]
      %v301 = vlaneseq
      %v302 = vshrl.u32 %v301, 7
      %v303 = vsub.s32 0, %v302
      %v304 = vrot.slane %v299, %v303
      %v306 = vadd.f32 %v297, %v304
      %v307 = vadd.f32 %v298, %v304
      %308 = vst.msk [vmem:[#allocation11] sm:$0xff] %vm119, %v306
      %309 = vst.msk [vmem:[#allocation11 + $0x8] sm:$0xff] %vm119, %v307
    $region49: #{tpu_custom_call.1} parent=1 // pred_fallthru
      _
    // Predicated region
    $region50: #{tpu_custom_call.1} parent=1 // pred_check
      _
    $region51: #{tpu_custom_call.1} parent=1 // pred_check_branch
      %311 = sbr.rel (0) target = $region53
    $region52: #{tpu_custom_call.1} parent=1 // pred_region
      %s313 = ssub.s32 256, 256
      %314 = vsyncadd [#allocation4], %s313
      %s315 = sshll.u32 [#allocation11], 4
      %s316 = int_to_ptr.vmem [resolvable:$true] %s315
      %321 = dma.vmem_to_hbm [thread:$0]  %s316, 256, %s5, [#allocation4], 128, 128, 8
    $region53: #{tpu_custom_call.1} parent=1 // pred_fallthru
      _
    // Predicated region
    $region54: #{tpu_custom_call.1} parent=1 // pred_check
      _
    $region55: #{tpu_custom_call.1} parent=1 // pred_check_branch
      %323 = sbr.rel (0) target = $region57
    $region56: #{tpu_custom_call.1} parent=1 // pred_region
      %324 = dma.done [#allocation4], 256
    $region57: #{tpu_custom_call.1} parent=1 // pred_fallthru
      _
    %325 = vsyncpa [#allocation3], 1
    %326 = vsyncpa [#allocation6], 1
    %327 = vsyncpa [#allocation9], 1
    %328 = vsyncpa [#allocation4], 1

</llo_original>
